<compile_context>
chip_gen: v7x
topology: tpu7x:2x2x1
jax: 0.10.0
libtpu: 0.0.40
codegen_flags: <defaults>
</compile_context>

<pallas_src>
import functools

import jax
import jax.numpy as jnp
from jax import lax
from jax.experimental import pallas as pl
from jax.experimental.pallas import tpu as pltpu


# ----------------------------- Pallas kernel -------------------------------

def _dynamic_embedding_kernel(tok_ref, fixed_ref, oov_ref, out_ref, *,
                              vocab_size, oov_size, seq_len, token_tile, unroll):
    """One grid step = one (batch, token-tile) slab.

    tok_ref   : (B*S,) int32 in SMEM (scalar prefetch, flattened)
    fixed_ref : (V, D)   VMEM-resident fixed embedding table (fetched once)
    oov_ref   : (OOV, D) VMEM-resident OOV rows for this batch
    out_ref   : (TS, D)  dense output slab for this token tile
    """
    b = pl.program_id(0)
    si = pl.program_id(1)
    base = b * seq_len + si * token_tile

    def body(i, carry):
        t = tok_ref[base + i]
        # Defensive clamp: out-of-range / negative tokens would otherwise read
        # out of bounds (PyTorch's F.embedding raises on them instead).
        t = jnp.clip(t, 0, vocab_size + oov_size - 1)
        is_fixed = t < vocab_size
        fixed_row = fixed_ref[jnp.where(is_fixed, t, 0), :]
        oov_row = oov_ref[jnp.where(is_fixed, 0, t - vocab_size), :]
        out_ref[i, :] = jnp.where(is_fixed, fixed_row, oov_row)
        return carry

    lax.fori_loop(0, token_tile, body, 0, unroll=unroll)


# ------------------------------- wrapper ------------------------------------

def _pick_token_tile(seq_len):
    """Largest tile (<=512, multiple of 8) that divides S, else full S."""
    for ts in (512, 256, 128, 64, 32, 16, 8):
        if seq_len % ts == 0:
            return ts
    return seq_len  # block == full dim is always layout-legal


def dynamic_embedding(fixed_weights, oov_features, tokens, *, padding_idx):
    """features (B, S, D), (padding_mask (B,1,1,S), sequential_mask (S,S))."""
    V, D = fixed_weights.shape
    B, OOV, D2 = oov_features.shape
    assert D == D2, "oov_features last dim must equal d_model"
    Bt, S = tokens.shape
    assert Bt == B
    assert fixed_weights.dtype == oov_features.dtype

    tokens = tokens.astype(jnp.int32)
    TS = _pick_token_tile(S)
    n_tiles = S // TS

    itemsize = jnp.dtype(fixed_weights.dtype).itemsize
    # fixed table (single-buffered, constant index) + double-buffered OOV block
    # + double-buffered output slab.
    resident_bytes = (V * D + 2 * OOV * D + 2 * TS * D) * itemsize
    VMEM_BUDGET = 48 * 1024 * 1024  # conservative: v7x has 64 MiB per TensorCore
    if resident_bytes > VMEM_BUDGET:
        # TODO(synk): manual multi-in-flight DMA gather (memory_space=pl.ANY +
        # pltpu.make_async_copy ring) for tables too large to be VMEM-resident.
        raise NotImplementedError(
            "fixed embedding table does not fit the VMEM budget; "
            "manual DMA-gather fallback not implemented")

    vmem_limit = int(min(max(32 * 1024 * 1024, resident_bytes + (2 << 20)),
                         VMEM_BUDGET + (8 << 20)))

    kernel = functools.partial(
        _dynamic_embedding_kernel,
        vocab_size=V, oov_size=OOV, seq_len=S, token_tile=TS,
        unroll=bool(TS <= 64))

    grid_spec = pltpu.PrefetchScalarGridSpec(
        num_scalar_prefetch=1,
        grid=(B, n_tiles),
        in_specs=[
            # Whole fixed table, constant block index -> DMA'd once, stays resident.
            pl.BlockSpec((V, D), lambda b, si, tok: (0, 0)),
            # This batch's OOV rows; block index changes only with b.
            pl.BlockSpec((None, OOV, D), lambda b, si, tok: (b, 0, 0)),
        ],
        # Dense (TS, D) output slab per step (lane- and sublane-dense writeback).
        out_specs=pl.BlockSpec((None, TS, D), lambda b, si, tok: (b, si, 0)),
    )

    features = pl.pallas_call(
        kernel,
        out_shape=jax.ShapeDtypeStruct((B, S, D), fixed_weights.dtype),
        grid_spec=grid_spec,
        compiler_params=pltpu.CompilerParams(
            dimension_semantics=("parallel", "parallel"),
            vmem_limit_bytes=vmem_limit),
    )(tokens.reshape(-1), fixed_weights, oov_features)

    # generate_padding_mask: True where token == padding_idx, shape (B, 1, 1, S)
    padding_mask = (tokens == padding_idx)[:, None, None, :]
    # generate_sequential_mask: True strictly above the diagonal, shape (S, S)
    sequential_mask = jnp.triu(jnp.ones((S, S), dtype=jnp.bool_), k=1)

    return features, (padding_mask, sequential_mask)


# --------------------------------- main -------------------------------------

if __name__ == "__main__":
    B, S = 2, 8
    VOCAB = 32          # len(vocab): rows of the fixed (learned) table
    OOV = 8             # per-batch OOV feature rows appended to the table
    D_MODEL = 128
    PAD_IDX = 0         # vocab.padding_idx

    key = jax.random.PRNGKey(0)
    k_fixed, k_oov, k_tok = jax.random.split(key, 3)

    # xavier_uniform_ init of the fixed embedding table
    limit = (6.0 / (VOCAB + D_MODEL)) ** 0.5
    fixed_weights = jax.random.uniform(
        k_fixed, (VOCAB, D_MODEL), jnp.float32, -limit, limit)
    oov_features = jax.random.normal(k_oov, (B, OOV, D_MODEL), jnp.float32)

    tokens = jax.random.randint(k_tok, (B, S), 0, VOCAB + OOV, dtype=jnp.int32)
    tokens = tokens.at[0, 6:].set(PAD_IDX)     # exercise the padding-mask path
    tokens = tokens.at[1, 3].set(VOCAB + 2)    # force at least one OOV lookup

    feats, (pad_mask, seq_mask) = dynamic_embedding(
        fixed_weights, oov_features, tokens, padding_idx=PAD_IDX)
    feats = jax.block_until_ready(feats)
    pad_mask = jax.block_until_ready(pad_mask)
    seq_mask = jax.block_until_ready(seq_mask)

    # pure-JAX reference reproducing the PyTorch expand+concat+gather semantics
    weights_ref = jnp.concatenate(
        [jnp.broadcast_to(fixed_weights[None], (B, VOCAB, D_MODEL)), oov_features],
        axis=1)
    feats_ref = jnp.take_along_axis(weights_ref, tokens[..., None], axis=1)

    assert feats.shape == (B, S, D_MODEL)
    assert pad_mask.shape == (B, 1, 1, S)
    assert seq_mask.shape == (S, S)
    assert bool(jnp.all(pad_mask == (tokens == PAD_IDX)[:, None, None, :]))
    assert bool(jnp.all(seq_mask == jnp.triu(jnp.ones((S, S), jnp.bool_), k=1)))
    assert bool(jnp.allclose(feats, feats_ref))
    assert bool(jnp.all(jnp.isfinite(feats)))
    print("KERNEL_OK")
</pallas_src>

<mosaic_0001>
module attributes {stable_mosaic.version = 11 : i64} {
  func.func @_dynamic_embedding_kernel(%arg0: i32, %arg1: i32, %arg2: memref<16xi32, #tpu.memory_space<smem>>, %arg3: memref<32x128xf32, #tpu.memory_space<vmem>>, %arg4: memref<1x8x128xf32, #tpu.memory_space<vmem>>, %arg5: memref<1x8x128xf32, #tpu.memory_space<vmem>>) attributes {dimension_semantics = [#tpu.dimension_semantics<parallel>, #tpu.dimension_semantics<parallel>], iteration_bounds = array<i64: 2, 1>, scalar_prefetch = 1 : i64, scratch_operands = 0 : i64, tpu.core_type = #tpu.core_type<tc>, window_params = [{pipeline_mode = #tpu.pipeline_mode<synchronous>, transform_indices = @transform_0, window_bounds = array<i64: 32, 128>}, {transform_indices = @transform_1, window_bounds = array<i64: 1, 8, 128>}, {transform_indices = @transform_2, window_bounds = array<i64: 1, 8, 128>}]} {
    %c8_i32 = arith.constant 8 : i32
    %0 = arith.muli %arg0, %c8_i32 : i32
    %c8_i32_0 = arith.constant 8 : i32
    %1 = arith.muli %arg1, %c8_i32_0 : i32
    %2 = arith.addi %0, %1 : i32
    %c0_i32 = arith.constant 0 : i32
    %3 = arith.addi %2, %c0_i32 : i32
    %4 = arith.index_cast %3 : i32 to index
    %5 = memref.load %arg2[%4] : memref<16xi32, #tpu.memory_space<smem>>
    %c0_i32_1 = arith.constant 0 : i32
    %c39_i32 = arith.constant 39 : i32
    %6 = arith.maxsi %c0_i32_1, %5 : i32
    %7 = arith.minsi %c39_i32, %6 : i32
    %c32_i32 = arith.constant 32 : i32
    %8 = arith.cmpi slt, %7, %c32_i32 : i32
    %c0_i32_2 = arith.constant 0 : i32
    %9 = arith.select %8, %7, %c0_i32_2 : i32
    %10 = arith.index_cast %9 : i32 to index
    %c0 = arith.constant 0 : index
    %11 = vector.load %arg3[%10, %c0] : memref<32x128xf32, #tpu.memory_space<vmem>>, vector<1x128xf32>
    %12 = vector.shape_cast %11 : vector<1x128xf32> to vector<128xf32>
    %c32_i32_3 = arith.constant 32 : i32
    %13 = arith.subi %7, %c32_i32_3 : i32
    %c0_i32_4 = arith.constant 0 : i32
    %14 = arith.select %8, %c0_i32_4, %13 : i32
    %c0_5 = arith.constant 0 : index
    %15 = arith.index_cast %14 : i32 to index
    %c0_6 = arith.constant 0 : index
    %16 = vector.load %arg4[%c0_5, %15, %c0_6] : memref<1x8x128xf32, #tpu.memory_space<vmem>>, vector<1x1x128xf32>
    %17 = vector.shape_cast %16 : vector<1x1x128xf32> to vector<128xf32>
    %18 = arith.select %8, %12, %17 : vector<128xf32>
    %c0_7 = arith.constant 0 : index
    %19 = arith.index_cast %c0_i32 : i32 to index
    %c0_8 = arith.constant 0 : index
    %20 = vector.load %arg5[%c0_7, %19, %c0_8] : memref<1x8x128xf32, #tpu.memory_space<vmem>>, vector<1x1x128xf32>
    %21 = vector.shape_cast %20 : vector<1x1x128xf32> to vector<128xf32>
    %22 = vector.shape_cast %18 : vector<128xf32> to vector<1x1x128xf32>
    tpu.vector_store %arg5[%c0_7, %19, %c0_8], %22 {strides = array<i32>} : memref<1x8x128xf32, #tpu.memory_space<vmem>>, vector<1x1x128xf32>,
    %c1_i32 = arith.constant 1 : i32
    %23 = arith.addi %2, %c1_i32 : i32
    %24 = arith.index_cast %23 : i32 to index
    %25 = memref.load %arg2[%24] : memref<16xi32, #tpu.memory_space<smem>>
    %c0_i32_9 = arith.constant 0 : i32
    %c39_i32_10 = arith.constant 39 : i32
    %26 = arith.maxsi %c0_i32_9, %25 : i32
    %27 = arith.minsi %c39_i32_10, %26 : i32
    %c32_i32_11 = arith.constant 32 : i32
    %28 = arith.cmpi slt, %27, %c32_i32_11 : i32
    %c0_i32_12 = arith.constant 0 : i32
    %29 = arith.select %28, %27, %c0_i32_12 : i32
    %30 = arith.index_cast %29 : i32 to index
    %c0_13 = arith.constant 0 : index
    %31 = vector.load %arg3[%30, %c0_13] : memref<32x128xf32, #tpu.memory_space<vmem>>, vector<1x128xf32>
    %32 = vector.shape_cast %31 : vector<1x128xf32> to vector<128xf32>
    %c32_i32_14 = arith.constant 32 : i32
    %33 = arith.subi %27, %c32_i32_14 : i32
    %c0_i32_15 = arith.constant 0 : i32
    %34 = arith.select %28, %c0_i32_15, %33 : i32
    %c0_16 = arith.constant 0 : index
    %35 = arith.index_cast %34 : i32 to index
    %c0_17 = arith.constant 0 : index
    %36 = vector.load %arg4[%c0_16, %35, %c0_17] : memref<1x8x128xf32, #tpu.memory_space<vmem>>, vector<1x1x128xf32>
    %37 = vector.shape_cast %36 : vector<1x1x128xf32> to vector<128xf32>
    %38 = arith.select %28, %32, %37 : vector<128xf32>
    %c0_18 = arith.constant 0 : index
    %39 = arith.index_cast %c1_i32 : i32 to index
    %c0_19 = arith.constant 0 : index
    %40 = vector.load %arg5[%c0_18, %39, %c0_19] : memref<1x8x128xf32, #tpu.memory_space<vmem>>, vector<1x1x128xf32>
    %41 = vector.shape_cast %40 : vector<1x1x128xf32> to vector<128xf32>
    %42 = vector.shape_cast %38 : vector<128xf32> to vector<1x1x128xf32>
    tpu.vector_store %arg5[%c0_18, %39, %c0_19], %42 {strides = array<i32>} : memref<1x8x128xf32, #tpu.memory_space<vmem>>, vector<1x1x128xf32>,
    %c2_i32 = arith.constant 2 : i32
    %43 = arith.addi %2, %c2_i32 : i32
    %44 = arith.index_cast %43 : i32 to index
    %45 = memref.load %arg2[%44] : memref<16xi32, #tpu.memory_space<smem>>
    %c0_i32_20 = arith.constant 0 : i32
    %c39_i32_21 = arith.constant 39 : i32
    %46 = arith.maxsi %c0_i32_20, %45 : i32
    %47 = arith.minsi %c39_i32_21, %46 : i32
    %c32_i32_22 = arith.constant 32 : i32
    %48 = arith.cmpi slt, %47, %c32_i32_22 : i32
    %c0_i32_23 = arith.constant 0 : i32
    %49 = arith.select %48, %47, %c0_i32_23 : i32
    %50 = arith.index_cast %49 : i32 to index
    %c0_24 = arith.constant 0 : index
    %51 = vector.load %arg3[%50, %c0_24] : memref<32x128xf32, #tpu.memory_space<vmem>>, vector<1x128xf32>
    %52 = vector.shape_cast %51 : vector<1x128xf32> to vector<128xf32>
    %c32_i32_25 = arith.constant 32 : i32
    %53 = arith.subi %47, %c32_i32_25 : i32
    %c0_i32_26 = arith.constant 0 : i32
    %54 = arith.select %48, %c0_i32_26, %53 : i32
    %c0_27 = arith.constant 0 : index
    %55 = arith.index_cast %54 : i32 to index
    %c0_28 = arith.constant 0 : index
    %56 = vector.load %arg4[%c0_27, %55, %c0_28] : memref<1x8x128xf32, #tpu.memory_space<vmem>>, vector<1x1x128xf32>
    %57 = vector.shape_cast %56 : vector<1x1x128xf32> to vector<128xf32>
    %58 = arith.select %48, %52, %57 : vector<128xf32>
    %c0_29 = arith.constant 0 : index
    %59 = arith.index_cast %c2_i32 : i32 to index
    %c0_30 = arith.constant 0 : index
    %60 = vector.load %arg5[%c0_29, %59, %c0_30] : memref<1x8x128xf32, #tpu.memory_space<vmem>>, vector<1x1x128xf32>
    %61 = vector.shape_cast %60 : vector<1x1x128xf32> to vector<128xf32>
    %62 = vector.shape_cast %58 : vector<128xf32> to vector<1x1x128xf32>
    tpu.vector_store %arg5[%c0_29, %59, %c0_30], %62 {strides = array<i32>} : memref<1x8x128xf32, #tpu.memory_space<vmem>>, vector<1x1x128xf32>,
    %c3_i32 = arith.constant 3 : i32
    %63 = arith.addi %2, %c3_i32 : i32
    %64 = arith.index_cast %63 : i32 to index
    %65 = memref.load %arg2[%64] : memref<16xi32, #tpu.memory_space<smem>>
    %c0_i32_31 = arith.constant 0 : i32
    %c39_i32_32 = arith.constant 39 : i32
    %66 = arith.maxsi %c0_i32_31, %65 : i32
    %67 = arith.minsi %c39_i32_32, %66 : i32
    %c32_i32_33 = arith.constant 32 : i32
    %68 = arith.cmpi slt, %67, %c32_i32_33 : i32
    %c0_i32_34 = arith.constant 0 : i32
    %69 = arith.select %68, %67, %c0_i32_34 : i32
    %70 = arith.index_cast %69 : i32 to index
    %c0_35 = arith.constant 0 : index
    %71 = vector.load %arg3[%70, %c0_35] : memref<32x128xf32, #tpu.memory_space<vmem>>, vector<1x128xf32>
    %72 = vector.shape_cast %71 : vector<1x128xf32> to vector<128xf32>
    %c32_i32_36 = arith.constant 32 : i32
    %73 = arith.subi %67, %c32_i32_36 : i32
    %c0_i32_37 = arith.constant 0 : i32
    %74 = arith.select %68, %c0_i32_37, %73 : i32
    %c0_38 = arith.constant 0 : index
    %75 = arith.index_cast %74 : i32 to index
    %c0_39 = arith.constant 0 : index
    %76 = vector.load %arg4[%c0_38, %75, %c0_39] : memref<1x8x128xf32, #tpu.memory_space<vmem>>, vector<1x1x128xf32>
    %77 = vector.shape_cast %76 : vector<1x1x128xf32> to vector<128xf32>
    %78 = arith.select %68, %72, %77 : vector<128xf32>
    %c0_40 = arith.constant 0 : index
    %79 = arith.index_cast %c3_i32 : i32 to index
    %c0_41 = arith.constant 0 : index
    %80 = vector.load %arg5[%c0_40, %79, %c0_41] : memref<1x8x128xf32, #tpu.memory_space<vmem>>, vector<1x1x128xf32>
    %81 = vector.shape_cast %80 : vector<1x1x128xf32> to vector<128xf32>
    %82 = vector.shape_cast %78 : vector<128xf32> to vector<1x1x128xf32>
    tpu.vector_store %arg5[%c0_40, %79, %c0_41], %82 {strides = array<i32>} : memref<1x8x128xf32, #tpu.memory_space<vmem>>, vector<1x1x128xf32>,
    %c4_i32 = arith.constant 4 : i32
    %83 = arith.addi %2, %c4_i32 : i32
    %84 = arith.index_cast %83 : i32 to index
    %85 = memref.load %arg2[%84] : memref<16xi32, #tpu.memory_space<smem>>
    %c0_i32_42 = arith.constant 0 : i32
    %c39_i32_43 = arith.constant 39 : i32
    %86 = arith.maxsi %c0_i32_42, %85 : i32
    %87 = arith.minsi %c39_i32_43, %86 : i32
    %c32_i32_44 = arith.constant 32 : i32
    %88 = arith.cmpi slt, %87, %c32_i32_44 : i32
    %c0_i32_45 = arith.constant 0 : i32
    %89 = arith.select %88, %87, %c0_i32_45 : i32
    %90 = arith.index_cast %89 : i32 to index
    %c0_46 = arith.constant 0 : index
    %91 = vector.load %arg3[%90, %c0_46] : memref<32x128xf32, #tpu.memory_space<vmem>>, vector<1x128xf32>
    %92 = vector.shape_cast %91 : vector<1x128xf32> to vector<128xf32>
    %c32_i32_47 = arith.constant 32 : i32
    %93 = arith.subi %87, %c32_i32_47 : i32
    %c0_i32_48 = arith.constant 0 : i32
    %94 = arith.select %88, %c0_i32_48, %93 : i32
    %c0_49 = arith.constant 0 : index
    %95 = arith.index_cast %94 : i32 to index
    %c0_50 = arith.constant 0 : index
    %96 = vector.load %arg4[%c0_49, %95, %c0_50] : memref<1x8x128xf32, #tpu.memory_space<vmem>>, vector<1x1x128xf32>
    %97 = vector.shape_cast %96 : vector<1x1x128xf32> to vector<128xf32>
    %98 = arith.select %88, %92, %97 : vector<128xf32>
    %c0_51 = arith.constant 0 : index
    %99 = arith.index_cast %c4_i32 : i32 to index
    %c0_52 = arith.constant 0 : index
    %100 = vector.load %arg5[%c0_51, %99, %c0_52] : memref<1x8x128xf32, #tpu.memory_space<vmem>>, vector<1x1x128xf32>
    %101 = vector.shape_cast %100 : vector<1x1x128xf32> to vector<128xf32>
    %102 = vector.shape_cast %98 : vector<128xf32> to vector<1x1x128xf32>
    tpu.vector_store %arg5[%c0_51, %99, %c0_52], %102 {strides = array<i32>} : memref<1x8x128xf32, #tpu.memory_space<vmem>>, vector<1x1x128xf32>,
    %c5_i32 = arith.constant 5 : i32
    %103 = arith.addi %2, %c5_i32 : i32
    %104 = arith.index_cast %103 : i32 to index
    %105 = memref.load %arg2[%104] : memref<16xi32, #tpu.memory_space<smem>>
    %c0_i32_53 = arith.constant 0 : i32
    %c39_i32_54 = arith.constant 39 : i32
    %106 = arith.maxsi %c0_i32_53, %105 : i32
    %107 = arith.minsi %c39_i32_54, %106 : i32
    %c32_i32_55 = arith.constant 32 : i32
    %108 = arith.cmpi slt, %107, %c32_i32_55 : i32
    %c0_i32_56 = arith.constant 0 : i32
    %109 = arith.select %108, %107, %c0_i32_56 : i32
    %110 = arith.index_cast %109 : i32 to index
    %c0_57 = arith.constant 0 : index
    %111 = vector.load %arg3[%110, %c0_57] : memref<32x128xf32, #tpu.memory_space<vmem>>, vector<1x128xf32>
    %112 = vector.shape_cast %111 : vector<1x128xf32> to vector<128xf32>
    %c32_i32_58 = arith.constant 32 : i32
    %113 = arith.subi %107, %c32_i32_58 : i32
    %c0_i32_59 = arith.constant 0 : i32
    %114 = arith.select %108, %c0_i32_59, %113 : i32
    %c0_60 = arith.constant 0 : index
    %115 = arith.index_cast %114 : i32 to index
    %c0_61 = arith.constant 0 : index
    %116 = vector.load %arg4[%c0_60, %115, %c0_61] : memref<1x8x128xf32, #tpu.memory_space<vmem>>, vector<1x1x128xf32>
    %117 = vector.shape_cast %116 : vector<1x1x128xf32> to vector<128xf32>
    %118 = arith.select %108, %112, %117 : vector<128xf32>
    %c0_62 = arith.constant 0 : index
    %119 = arith.index_cast %c5_i32 : i32 to index
    %c0_63 = arith.constant 0 : index
    %120 = vector.load %arg5[%c0_62, %119, %c0_63] : memref<1x8x128xf32, #tpu.memory_space<vmem>>, vector<1x1x128xf32>
    %121 = vector.shape_cast %120 : vector<1x1x128xf32> to vector<128xf32>
    %122 = vector.shape_cast %118 : vector<128xf32> to vector<1x1x128xf32>
    tpu.vector_store %arg5[%c0_62, %119, %c0_63], %122 {strides = array<i32>} : memref<1x8x128xf32, #tpu.memory_space<vmem>>, vector<1x1x128xf32>,
    %c6_i32 = arith.constant 6 : i32
    %123 = arith.addi %2, %c6_i32 : i32
    %124 = arith.index_cast %123 : i32 to index
    %125 = memref.load %arg2[%124] : memref<16xi32, #tpu.memory_space<smem>>
    %c0_i32_64 = arith.constant 0 : i32
    %c39_i32_65 = arith.constant 39 : i32
    %126 = arith.maxsi %c0_i32_64, %125 : i32
    %127 = arith.minsi %c39_i32_65, %126 : i32
    %c32_i32_66 = arith.constant 32 : i32
    %128 = arith.cmpi slt, %127, %c32_i32_66 : i32
    %c0_i32_67 = arith.constant 0 : i32
    %129 = arith.select %128, %127, %c0_i32_67 : i32
    %130 = arith.index_cast %129 : i32 to index
    %c0_68 = arith.constant 0 : index
    %131 = vector.load %arg3[%130, %c0_68] : memref<32x128xf32, #tpu.memory_space<vmem>>, vector<1x128xf32>
    %132 = vector.shape_cast %131 : vector<1x128xf32> to vector<128xf32>
    %c32_i32_69 = arith.constant 32 : i32
    %133 = arith.subi %127, %c32_i32_69 : i32
    %c0_i32_70 = arith.constant 0 : i32
    %134 = arith.select %128, %c0_i32_70, %133 : i32
    %c0_71 = arith.constant 0 : index
    %135 = arith.index_cast %134 : i32 to index
    %c0_72 = arith.constant 0 : index
    %136 = vector.load %arg4[%c0_71, %135, %c0_72] : memref<1x8x128xf32, #tpu.memory_space<vmem>>, vector<1x1x128xf32>
    %137 = vector.shape_cast %136 : vector<1x1x128xf32> to vector<128xf32>
    %138 = arith.select %128, %132, %137 : vector<128xf32>
    %c0_73 = arith.constant 0 : index
    %139 = arith.index_cast %c6_i32 : i32 to index
    %c0_74 = arith.constant 0 : index
    %140 = vector.load %arg5[%c0_73, %139, %c0_74] : memref<1x8x128xf32, #tpu.memory_space<vmem>>, vector<1x1x128xf32>
    %141 = vector.shape_cast %140 : vector<1x1x128xf32> to vector<128xf32>
    %142 = vector.shape_cast %138 : vector<128xf32> to vector<1x1x128xf32>
    tpu.vector_store %arg5[%c0_73, %139, %c0_74], %142 {strides = array<i32>} : memref<1x8x128xf32, #tpu.memory_space<vmem>>, vector<1x1x128xf32>,
    %c7_i32 = arith.constant 7 : i32
    %143 = arith.addi %2, %c7_i32 : i32
    %144 = arith.index_cast %143 : i32 to index
    %145 = memref.load %arg2[%144] : memref<16xi32, #tpu.memory_space<smem>>
    %c0_i32_75 = arith.constant 0 : i32
    %c39_i32_76 = arith.constant 39 : i32
    %146 = arith.maxsi %c0_i32_75, %145 : i32
    %147 = arith.minsi %c39_i32_76, %146 : i32
    %c32_i32_77 = arith.constant 32 : i32
    %148 = arith.cmpi slt, %147, %c32_i32_77 : i32
    %c0_i32_78 = arith.constant 0 : i32
    %149 = arith.select %148, %147, %c0_i32_78 : i32
    %150 = arith.index_cast %149 : i32 to index
    %c0_79 = arith.constant 0 : index
    %151 = vector.load %arg3[%150, %c0_79] : memref<32x128xf32, #tpu.memory_space<vmem>>, vector<1x128xf32>
    %152 = vector.shape_cast %151 : vector<1x128xf32> to vector<128xf32>
    %c32_i32_80 = arith.constant 32 : i32
    %153 = arith.subi %147, %c32_i32_80 : i32
    %c0_i32_81 = arith.constant 0 : i32
    %154 = arith.select %148, %c0_i32_81, %153 : i32
    %c0_82 = arith.constant 0 : index
    %155 = arith.index_cast %154 : i32 to index
    %c0_83 = arith.constant 0 : index
    %156 = vector.load %arg4[%c0_82, %155, %c0_83] : memref<1x8x128xf32, #tpu.memory_space<vmem>>, vector<1x1x128xf32>
    %157 = vector.shape_cast %156 : vector<1x1x128xf32> to vector<128xf32>
    %158 = arith.select %148, %152, %157 : vector<128xf32>
    %c0_84 = arith.constant 0 : index
    %159 = arith.index_cast %c7_i32 : i32 to index
    %c0_85 = arith.constant 0 : index
    %160 = vector.load %arg5[%c0_84, %159, %c0_85] : memref<1x8x128xf32, #tpu.memory_space<vmem>>, vector<1x1x128xf32>
    %161 = vector.shape_cast %160 : vector<1x1x128xf32> to vector<128xf32>
    %162 = vector.shape_cast %158 : vector<128xf32> to vector<1x1x128xf32>
    tpu.vector_store %arg5[%c0_84, %159, %c0_85], %162 {strides = array<i32>} : memref<1x8x128xf32, #tpu.memory_space<vmem>>, vector<1x1x128xf32>,
    %c8_i32_86 = arith.constant 8 : i32
    return
  }
  func.func @transform_0(%arg0: i32, %arg1: i32, %arg2: memref<16xi32, #tpu.memory_space<smem>>) -> (i32, i32) {
    %c0_i32 = arith.constant 0 : i32
    %c0_i32_0 = arith.constant 0 : i32
    %c0_i32_1 = arith.constant 0 : i32
    return %c0_i32, %c0_i32_0 : i32, i32
  }
  func.func @transform_1(%arg0: i32, %arg1: i32, %arg2: memref<16xi32, #tpu.memory_space<smem>>) -> (i32, i32, i32) {
    %c0_i32 = arith.constant 0 : i32
    %c0_i32_0 = arith.constant 0 : i32
    %c0_i32_1 = arith.constant 0 : i32
    return %arg0, %c0_i32, %c0_i32_0 : i32, i32, i32
  }
  func.func @transform_2(%arg0: i32, %arg1: i32, %arg2: memref<16xi32, #tpu.memory_space<smem>>) -> (i32, i32, i32) {
    %c0_i32 = arith.constant 0 : i32
    %c0_i32_0 = arith.constant 0 : i32
    return %arg0, %arg1, %c0_i32 : i32, i32, i32
  }
}

</mosaic_0001>

<llo_original>
// kernel: tpu_custom_call.1
$region0: #{tpu_custom_call.1}
  #allocation0 [shape = 'u32[]', space=smem, size = 0x4, offset = 0x4, fixed_abs, tag = 'smem constant byte address 0x4 - core index']
  #allocation1 [shape = 'u32[144,128]{1,0:T(1,128)}', space=vmem, size = 0x12000, scoped, tag = 'internal scratch']
  #allocation2 [shape = 's32[1]{0}', space=sflag, size = 0x4, scoped, tag = 'scoped memory for tpu_custom_call.1']
  #allocation3 [shape = 'u8[512]{0}', space=smem, size = 0x200, scoped, tag = 'prefetched SMEM operand 0']
  %s0 = inlined_call_operand.hbm [shape: s32[16], index: 0, kind: input, shape index: {}]
  %s1 = inlined_call_operand.hbm [shape: f32[32,128], index: 1, kind: input, shape index: {}]
  %s2 = inlined_call_operand.hbm [shape: f32[2,8,128], index: 2, kind: input, shape index: {}]
  %s3 = inlined_call_operand.hbm [shape: f32[2,8,128], index: 3, kind: output, shape index: {}]
  %s4 = sld [smem:[#allocation0]]
  $region49: #{tpu_custom_call.1} parent=0
    _
  %s6 = ssub.s32 1, %s4
  %s7 = scalar_select 0, %s6, %s4
  %9 = dma.hbm_to_smem %s0, 16, [#allocation3], [#allocation2]
  %10 = dma.done [#allocation2], 16
  %11 = sfence
  $region1: #{tpu_custom_call.1} parent=0
    #allocation4 [shape = 'u8[16384]{0}', space=vmem, size = 0x4000, scoped, tag = 'input window, operand 1, single buffered']
    #allocation5 [shape = 's32[2]{0}', space=sflag, size = 0x8, scoped, tag = 'scoped memory for tpu_custom_call.1']
    #allocation6 [shape = 's32[2]{0}', space=sflag, size = 0x8, scoped, tag = 'scoped memory for tpu_custom_call.1']
    #allocation7 [shape = 'u8[8192]{0}', space=vmem, size = 0x2000, scoped, tag = 'input window, operand 2']
    #allocation8 [shape = 's32[2]{0}', space=sflag, size = 0x8, scoped, tag = 'scoped memory for tpu_custom_call.1']
    #allocation9 [shape = 'u8[8192]{0}', space=vmem, size = 0x2000, scoped, tag = 'output window, operand 0']
    %12 = vsyncpa [#allocation5], 0
    %13 = vsyncpa [#allocation8], 0
    %s14 = scalar_lea.sflag [#allocation8], 1
    %15 = vsyncpa %s14, 0
    %16 = vsyncpa [#allocation6], 0
    %s17 = scalar_lea.sflag [#allocation6], 1
    %18 = vsyncpa %s17, 0
    loop: start=0, step=1, limit=4
    $region2: #{tpu_custom_call.1} parent=1 // loop_pre_header
      _
    $region3: #{tpu_custom_call.1} parent=1 // loop_header
      %s20 = sphi 0, %s24
      %p21 = scmp.ge.s32.totalorder %s20, 4
      %s27 = sphi 0, %s39
      %s28 = sphi 0, %s35
      %s29 = sphi 0, %s27
      %s30 = sphi 0, %s28
      %s31 = sphi 0, %s29
      %s32 = sphi 0, %s30
      %s40 = sphi 0, %s40
      %s42 = sphi 0, %s40
      %s43 = sphi 0, %s42
      %s57 = sphi 0, %s43
      %s63 = sphi 0, %s65
      %s66 = sphi 0, %s63
      %s67 = sphi 0, %s66
      %s83 = sphi 0, %s67
      %s91 = sphi 0, %s93
      %s94 = sphi 0, %s91
      %s95 = sphi 0, %s94
      %s111 = sphi 0, %s95
    $region4: #{tpu_custom_call.1} parent=1 // loop_header_branch
      %23 = sbr.rel (%p21) target = $region8
    $region5: #{tpu_custom_call.1} parent=1 // loop_body
      %s25 = ssub.s32 %s20, 1
      %s26 = ssub.s32 %s20, 2
      %s33 = sadd.s32 1, %s28
      %p34 = scmp.ge.s32.totalorder %s33, 1
      %s35 = scalar_select %p34, 0, %s33
      %s36 = sadd.s32 1, %s27
      %s37 = scalar_select %p34, %s36, %s27
      %p38 = scmp.ge.s32.totalorder %s37, 2
      %s39 = scalar_select %p38, 0, %s37
      %s41 = sadd.s32 %s40, 1
      %p44 = scmp.eq.s32.totalorder %s20, 1
      %p45 = scmp.ne.s32.totalorder %s40, %s42
      %p46 = scmp.eq.s32.totalorder %s20, 0
      %p47 = por %p45, %p46
      %p48 = scmp.ne.s32.totalorder %s40, %s42
      %p49 = scmp.eq.s32.totalorder %s25, 1
      %p50 = por %p48, %p49
      %p51 = scmp.ne.s32.totalorder %s42, %s43
      %p52 = scmp.eq.s32.totalorder %s25, 0
      %p53 = por %p51, %p52
      %p54 = scmp.ne.s32.totalorder %s42, %s43
      %p55 = scmp.eq.s32.totalorder %s26, 1
      %p56 = por %p54, %p55
      %p58 = scmp.ne.s32.totalorder %s43, %s57
      %p59 = scmp.eq.s32.totalorder %s26, 0
      %p60 = por %p58, %p59
      %s61 = ssub.s32 %s27, %s39
      %p62 = scmp.eq.s32.totalorder %s61, 0
      %s64 = sadd.s32 %s63, 1
      %s65 = scalar_select %p62, %s63, %s64
      %p68 = pneg %p62
      %p69 = scmp.eq.s32.totalorder %s20, 1
      %p70 = por %p68, %p69
      %p71 = scmp.ne.s32.totalorder %s63, %s66
      %p72 = scmp.eq.s32.totalorder %s20, 0
      %p73 = por %p71, %p72
      %p74 = scmp.ne.s32.totalorder %s63, %s66
      %p75 = scmp.eq.s32.totalorder %s25, 1
      %p76 = por %p74, %p75
      %p77 = scmp.ne.s32.totalorder %s66, %s67
      %p78 = scmp.eq.s32.totalorder %s25, 0
      %p79 = por %p77, %p78
      %p80 = scmp.ne.s32.totalorder %s66, %s67
      %p81 = scmp.eq.s32.totalorder %s26, 1
      %p82 = por %p80, %p81
      %p84 = scmp.ne.s32.totalorder %s67, %s83
      %p85 = scmp.eq.s32.totalorder %s26, 0
      %p86 = por %p84, %p85
      %s87 = ssub.s32 %s27, %s39
      %s88 = ssub.s32 %s28, %s35
      %s89 = sor.u32 %s87, %s88
      %p90 = scmp.eq.s32.totalorder %s89, 0
      %s92 = sadd.s32 %s91, 1
      %s93 = scalar_select %p90, %s91, %s92
      %p96 = pneg %p90
      %p97 = scmp.eq.s32.totalorder %s20, 1
      %p98 = por %p96, %p97
      %p99 = scmp.ne.s32.totalorder %s91, %s94
      %p100 = scmp.eq.s32.totalorder %s20, 0
      %p101 = por %p99, %p100
      %p102 = scmp.ne.s32.totalorder %s91, %s94
      %p103 = scmp.eq.s32.totalorder %s25, 1
      %p104 = por %p102, %p103
      %p105 = scmp.ne.s32.totalorder %s94, %s95
      %p106 = scmp.eq.s32.totalorder %s25, 0
      %p107 = por %p105, %p106
      %p108 = scmp.ne.s32.totalorder %s94, %s95
      %p109 = scmp.eq.s32.totalorder %s26, 1
      %p110 = por %p108, %p109
      %p112 = scmp.ne.s32.totalorder %s95, %s111
      %p113 = scmp.eq.s32.totalorder %s26, 0
      %p114 = por %p112, %p113
      %p115 = scmp.le.s32.totalorder 1, %s20
      %p116 = scmp.lt.s32.totalorder %s20, 3
      %p117 = pnand %p115, %p116
      %p118 = pneg %p117
      // Predicated region
      $region9: #{tpu_custom_call.1} parent=5 // pred_check
        _
      $region10: #{tpu_custom_call.1} parent=5 // pred_check_branch
        %120 = sbr.rel (%p117) target = $region12
      $region11: #{tpu_custom_call.1} parent=5 // pred_region
        %s121 = ssub.s32 %s20, 1
        // Predicated region
        $region13: #{tpu_custom_call.1} parent=11 // pred_check
          %p122 = pneg %p53
        $region14: #{tpu_custom_call.1} parent=11 // pred_check_branch
          %124 = sbr.rel (%p122) target = $region16
        $region15: #{tpu_custom_call.1} parent=11 // pred_region
          %s126 = ssub.s32 512, 512
          %127 = vsyncadd [#allocation5], %s126
          %s128 = sshll.u32 [#allocation4], 4
          %s129 = int_to_ptr.vmem [resolvable:$true] %s128
          %134 = dma.hbm_to_vmem [thread:$0]  %s1, 512, %s129, [#allocation5], 128, 128, 8
        $region16: #{tpu_custom_call.1} parent=11 // pred_fallthru
          _
      $region12: #{tpu_custom_call.1} parent=5 // pred_fallthru
        _
      %p135 = scmp.lt.s32.totalorder %s20, 2
      // Predicated region
      $region17: #{tpu_custom_call.1} parent=5 // pred_check
        %p136 = pneg %p135
      $region18: #{tpu_custom_call.1} parent=5 // pred_check_branch
        %138 = sbr.rel (%p136) target = $region20
      $region19: #{tpu_custom_call.1} parent=5 // pred_region
        // Predicated region
        $region21: #{tpu_custom_call.1} parent=19 // pred_check
          %p139 = pneg %p73
        $region22: #{tpu_custom_call.1} parent=19 // pred_check_branch
          %141 = sbr.rel (%p139) target = $region24
        $region23: #{tpu_custom_call.1} parent=19 // pred_region
          %s142 = sand.u32 %s63, 1
          %s143 = scalar_lea.sflag [#allocation8], %s142
          %s144 = sand.u32 %s63, 1
          %s145 = smul.addr %s144, 8
          %s146 = scalar_lea.vmem [#allocation7], %s145
          %s148 = ssub.s32 128, 128
          %149 = vsyncadd %s143, %s148
          %s150 = smul.addr %s27, 128
          %s151 = scalar_lea.hbm %s2, %s150
          %s153 = sshll.u32 %s146, 4
          %s154 = int_to_ptr.vmem [resolvable:$true] %s153
          %156 = dma.hbm_to_vmem [thread:$0]  %s151, 128, %s154, %s143
        $region24: #{tpu_custom_call.1} parent=19 // pred_fallthru
          _
      $region20: #{tpu_custom_call.1} parent=5 // pred_fallthru
        _
      %p157 = scmp.le.s32.totalorder 1, %s20
      %p158 = scmp.lt.s32.totalorder %s20, 3
      %p159 = pnand %p157, %p158
      %p160 = pneg %p159
      // Predicated region
      $region25: #{tpu_custom_call.1} parent=5 // pred_check
        _
      $region26: #{tpu_custom_call.1} parent=5 // pred_check_branch
        %162 = sbr.rel (%p159) target = $region28
      $region27: #{tpu_custom_call.1} parent=5 // pred_region
        %s163 = ssub.s32 %s20, 1
        // Predicated region
        $region29: #{tpu_custom_call.1} parent=27 // pred_check
          %p164 = pneg %p53
        $region30: #{tpu_custom_call.1} parent=27 // pred_check_branch
          %166 = sbr.rel (%p164) target = $region32
        $region31: #{tpu_custom_call.1} parent=27 // pred_region
          %167 = dma.done [#allocation5], 512
        $region32: #{tpu_custom_call.1} parent=27 // pred_fallthru
          _
        %s168 = sand.u32 %s66, 1
        %s169 = scalar_lea.sflag [#allocation8], %s168
        %s170 = sand.u32 %s66, 1
        %s171 = smul.addr %s170, 8
        %s172 = scalar_lea.vmem [#allocation7], %s171
        // Predicated region
        $region33: #{tpu_custom_call.1} parent=27 // pred_check
          %p173 = pneg %p79
        $region34: #{tpu_custom_call.1} parent=27 // pred_check_branch
          %175 = sbr.rel (%p173) target = $region36
        $region35: #{tpu_custom_call.1} parent=27 // pred_region
          %176 = dma.done %s169, 128
        $region36: #{tpu_custom_call.1} parent=27 // pred_fallthru
          _
        %p177 = pneg %p53
        %p178 = pneg %p50
        %s179 = sand.u32 %s66, 1
        %s180 = scalar_lea.sflag [#allocation8], %s179
        %s181 = sand.u32 %s66, 1
        %s182 = smul.addr %s181, 8
        %s183 = scalar_lea.vmem [#allocation7], %s182
        %p184 = pneg %p79
        %p185 = pneg %p76
        %p186 = pneg %p107
        %p187 = pneg %p104
        %s188 = sand.u32 %s94, 1
        %s189 = scalar_lea.sflag [#allocation6], %s188
        %s190 = sand.u32 %s94, 1
        %s191 = smul.addr %s190, 8
        %s192 = scalar_lea.vmem [#allocation9], %s191
        %s193 = smul.u32 %s29, 8
        %s194 = smul.u32 %s30, 8
        %s195 = sadd.s32 %s193, %s194
        %s196 = sld [smem:[#allocation3 + %s195]]
        %p197 = scmp.gt.s32.totalorder %s196, 0
        %s198 = scalar_select %p197, %s196, 0
        %p199 = scmp.lt.s32.totalorder %s198, 39
        %s200 = scalar_select %p199, %s198, 39
        %p201 = scmp.lt.s32.totalorder %s200, 32
        %s202 = scalar_select %p201, %s200, 0
        %s203 = scalar_lea.vmem [#allocation4], %s202
        %v204 = vld [vmem:[%s203] sm:$0x1]
        %s205 = ssub.s32 %s200, 32
        %s206 = scalar_select %p201, 0, %s205
        %s207 = scalar_lea.vmem %s172, %s206 [#allocation7]
        %v208 = vld [vmem:[%s207] sm:$0x1]
        %s209 = scalar_select %p201, 1, 0
        %v210 = vstv %s209
        %vm211 = vcmp.eq.s32.totalorder %v210, 1
        %v212 = vsel %vm211, %v204, %v208
        %213 = vst [vmem:[%s192] sm:$0x1] %v212
        %s214 = sadd.s32 %s195, 1
        %s215 = sld [smem:[#allocation3 + %s214]]
        %p216 = scmp.gt.s32.totalorder %s215, 0
        %s217 = scalar_select %p216, %s215, 0
        %p218 = scmp.lt.s32.totalorder %s217, 39
        %s219 = scalar_select %p218, %s217, 39
        %p220 = scmp.lt.s32.totalorder %s219, 32
        %s221 = scalar_select %p220, %s219, 0
        %s222 = scalar_lea.vmem [#allocation4], %s221
        %v223 = vld [vmem:[%s222] sm:$0x1]
        %s224 = ssub.s32 %s219, 32
        %s225 = scalar_select %p220, 0, %s224
        %s226 = scalar_lea.vmem %s172, %s225 [#allocation7]
        %v227 = vld [vmem:[%s226] sm:$0x1]
        %s228 = scalar_select %p220, 1, 0
        %v229 = vstv %s228
        %vm230 = vcmp.eq.s32.totalorder %v229, 1
        %v231 = vsel %vm230, %v223, %v227
        %232 = vst [vmem:[%s192 + $0x1] sm:$0x1] %v231
        %s233 = sadd.s32 %s195, 2
        %s234 = sld [smem:[#allocation3 + %s233]]
        %p235 = scmp.gt.s32.totalorder %s234, 0
        %s236 = scalar_select %p235, %s234, 0
        %p237 = scmp.lt.s32.totalorder %s236, 39
        %s238 = scalar_select %p237, %s236, 39
        %p239 = scmp.lt.s32.totalorder %s238, 32
        %s240 = scalar_select %p239, %s238, 0
        %s241 = scalar_lea.vmem [#allocation4], %s240
        %v242 = vld [vmem:[%s241] sm:$0x1]
        %s243 = ssub.s32 %s238, 32
        %s244 = scalar_select %p239, 0, %s243
        %s245 = scalar_lea.vmem %s172, %s244 [#allocation7]
        %v246 = vld [vmem:[%s245] sm:$0x1]
        %s247 = scalar_select %p239, 1, 0
        %v248 = vstv %s247
        %vm249 = vcmp.eq.s32.totalorder %v248, 1
        %v250 = vsel %vm249, %v242, %v246
        %251 = vst [vmem:[%s192 + $0x2] sm:$0x1] %v250
        %s252 = sadd.s32 %s195, 3
        %s253 = sld [smem:[#allocation3 + %s252]]
        %p254 = scmp.gt.s32.totalorder %s253, 0
        %s255 = scalar_select %p254, %s253, 0
        %p256 = scmp.lt.s32.totalorder %s255, 39
        %s257 = scalar_select %p256, %s255, 39
        %p258 = scmp.lt.s32.totalorder %s257, 32
        %s259 = scalar_select %p258, %s257, 0
        %s260 = scalar_lea.vmem [#allocation4], %s259
        %v261 = vld [vmem:[%s260] sm:$0x1]
        %s262 = ssub.s32 %s257, 32
        %s263 = scalar_select %p258, 0, %s262
        %s264 = scalar_lea.vmem %s172, %s263 [#allocation7]
        %v265 = vld [vmem:[%s264] sm:$0x1]
        %s266 = scalar_select %p258, 1, 0
        %v267 = vstv %s266
        %vm268 = vcmp.eq.s32.totalorder %v267, 1
        %v269 = vsel %vm268, %v261, %v265
        %270 = vst [vmem:[%s192 + $0x3] sm:$0x1] %v269
        %s271 = sadd.s32 %s195, 4
        %s272 = sld [smem:[#allocation3 + %s271]]
        %p273 = scmp.gt.s32.totalorder %s272, 0
        %s274 = scalar_select %p273, %s272, 0
        %p275 = scmp.lt.s32.totalorder %s274, 39
        %s276 = scalar_select %p275, %s274, 39
        %p277 = scmp.lt.s32.totalorder %s276, 32
        %s278 = scalar_select %p277, %s276, 0
        %s279 = scalar_lea.vmem [#allocation4], %s278
        %v280 = vld [vmem:[%s279] sm:$0x1]
        %s281 = ssub.s32 %s276, 32
        %s282 = scalar_select %p277, 0, %s281
        %s283 = scalar_lea.vmem %s172, %s282 [#allocation7]
        %v284 = vld [vmem:[%s283] sm:$0x1]
        %s285 = scalar_select %p277, 1, 0
        %v286 = vstv %s285
        %vm287 = vcmp.eq.s32.totalorder %v286, 1
        %v288 = vsel %vm287, %v280, %v284
        %289 = vst [vmem:[%s192 + $0x4] sm:$0x1] %v288
        %s290 = sadd.s32 %s195, 5
        %s291 = sld [smem:[#allocation3 + %s290]]
        %p292 = scmp.gt.s32.totalorder %s291, 0
        %s293 = scalar_select %p292, %s291, 0
        %p294 = scmp.lt.s32.totalorder %s293, 39
        %s295 = scalar_select %p294, %s293, 39
        %p296 = scmp.lt.s32.totalorder %s295, 32
        %s297 = scalar_select %p296, %s295, 0
        %s298 = scalar_lea.vmem [#allocation4], %s297
        %v299 = vld [vmem:[%s298] sm:$0x1]
        %s300 = ssub.s32 %s295, 32
        %s301 = scalar_select %p296, 0, %s300
        %s302 = scalar_lea.vmem %s172, %s301 [#allocation7]
        %v303 = vld [vmem:[%s302] sm:$0x1]
        %s304 = scalar_select %p296, 1, 0
        %v305 = vstv %s304
        %vm306 = vcmp.eq.s32.totalorder %v305, 1
        %v307 = vsel %vm306, %v299, %v303
        %308 = vst [vmem:[%s192 + $0x5] sm:$0x1] %v307
        %s309 = sadd.s32 %s195, 6
        %s310 = sld [smem:[#allocation3 + %s309]]
        %p311 = scmp.gt.s32.totalorder %s310, 0
        %s312 = scalar_select %p311, %s310, 0
        %p313 = scmp.lt.s32.totalorder %s312, 39
        %s314 = scalar_select %p313, %s312, 39
        %p315 = scmp.lt.s32.totalorder %s314, 32
        %s316 = scalar_select %p315, %s314, 0
        %s317 = scalar_lea.vmem [#allocation4], %s316
        %v318 = vld [vmem:[%s317] sm:$0x1]
        %s319 = ssub.s32 %s314, 32
        %s320 = scalar_select %p315, 0, %s319
        %s321 = scalar_lea.vmem %s172, %s320 [#allocation7]
        %v322 = vld [vmem:[%s321] sm:$0x1]
        %s323 = scalar_select %p315, 1, 0
        %v324 = vstv %s323
        %vm325 = vcmp.eq.s32.totalorder %v324, 1
        %v326 = vsel %vm325, %v318, %v322
        %327 = vst [vmem:[%s192 + $0x6] sm:$0x1] %v326
        %s328 = sadd.s32 %s195, 7
        %s329 = sld [smem:[#allocation3 + %s328]]
        %p330 = scmp.gt.s32.totalorder %s329, 0
        %s331 = scalar_select %p330, %s329, 0
        %p332 = scmp.lt.s32.totalorder %s331, 39
        %s333 = scalar_select %p332, %s331, 39
        %p334 = scmp.lt.s32.totalorder %s333, 32
        %s335 = scalar_select %p334, %s333, 0
        %s336 = scalar_lea.vmem [#allocation4], %s335
        %v337 = vld [vmem:[%s336] sm:$0x1]
        %s338 = ssub.s32 %s333, 32
        %s339 = scalar_select %p334, 0, %s338
        %s340 = scalar_lea.vmem %s172, %s339 [#allocation7]
        %v341 = vld [vmem:[%s340] sm:$0x1]
        %s342 = scalar_select %p334, 1, 0
        %v343 = vstv %s342
        %vm344 = vcmp.eq.s32.totalorder %v343, 1
        %v345 = vsel %vm344, %v337, %v341
        %346 = vst [vmem:[%s192 + $0x7] sm:$0x1] %v345
        %s347 = sand.u32 %s94, 1
        %s348 = scalar_lea.sflag [#allocation6], %s347
        %s349 = sand.u32 %s94, 1
        %s350 = smul.addr %s349, 8
        %s351 = scalar_lea.vmem [#allocation9], %s350
        // Predicated region
        $region37: #{tpu_custom_call.1} parent=27 // pred_check
          %p352 = pneg %p104
        $region38: #{tpu_custom_call.1} parent=27 // pred_check_branch
          %354 = sbr.rel (%p352) target = $region40
        $region39: #{tpu_custom_call.1} parent=27 // pred_region
          %s356 = ssub.s32 128, 128
          %357 = vsyncadd %s348, %s356
          %s358 = sadd.s32 %s30, %s29
          %s359 = smul.addr %s358, 128
          %s360 = scalar_lea.hbm %s3, %s359
          %s362 = sshll.u32 %s351, 4
          %s363 = int_to_ptr.vmem [resolvable:$true] %s362
          %365 = dma.vmem_to_hbm [thread:$0]  %s363, 128, %s360, %s348
        $region40: #{tpu_custom_call.1} parent=27 // pred_fallthru
          _
      $region28: #{tpu_custom_call.1} parent=5 // pred_fallthru
        _
      %p366 = scmp.le.s32.totalorder 2, %s20
      // Predicated region
      $region41: #{tpu_custom_call.1} parent=5 // pred_check
        %p367 = pneg %p366
      $region42: #{tpu_custom_call.1} parent=5 // pred_check_branch
        %369 = sbr.rel (%p367) target = $region44
      $region43: #{tpu_custom_call.1} parent=5 // pred_region
        %s370 = ssub.s32 %s20, 2
        // Predicated region
        $region45: #{tpu_custom_call.1} parent=43 // pred_check
          %p371 = pneg %p110
        $region46: #{tpu_custom_call.1} parent=43 // pred_check_branch
          %373 = sbr.rel (%p371) target = $region48
        $region47: #{tpu_custom_call.1} parent=43 // pred_region
          %s374 = sand.u32 %s95, 1
          %s375 = scalar_lea.sflag [#allocation6], %s374
          %s376 = sand.u32 %s95, 1
          %s377 = smul.addr %s376, 8
          %s378 = scalar_lea.vmem [#allocation9], %s377
          %379 = dma.done %s375, 128
        $region48: #{tpu_custom_call.1} parent=43 // pred_fallthru
          _
      $region44: #{tpu_custom_call.1} parent=5 // pred_fallthru
        _
    $region6: #{tpu_custom_call.1} parent=1 // loop_footer
      %s24 = sadd.s32 1, %s20
    $region7: #{tpu_custom_call.1} parent=1 // loop_footer_branch
      %19 = sbr.rel target = $region3
    $region8: #{tpu_custom_call.1} parent=1 // loop_exit
      _
    %380 = vsyncpa [#allocation5], 1
    %s381 = scalar_lea.sflag [#allocation5], 1
    %382 = vsyncpa %s381, 1
    %383 = vsyncpa [#allocation8], 1
    %s384 = scalar_lea.sflag [#allocation8], 1
    %385 = vsyncpa %s384, 1
    %386 = vsyncpa [#allocation6], 1
    %s387 = scalar_lea.sflag [#allocation6], 1
    %388 = vsyncpa %s387, 1

</llo_original>
